<compile_context>
chip_gen: v6e
topology: v6e:2x2x1
jax: 0.10.0
libtpu: 0.0.40
codegen_flags: <defaults>
</compile_context>

<pallas_src>
import jax
import jax.numpy as jnp
from jax.experimental import pallas as pl
from jax.experimental.pallas import tpu as pltpu

NEG_SLOPE = 0.01  # PyTorch nn.LeakyReLU default negative_slope


def _leaky_relu(x):
    return jnp.where(x > 0, x, NEG_SLOPE * x)


def _round_up(n, m):
    return ((n + m - 1) // m) * m


def mlp_kernel(x_ref, w0_ref, b0_ref, w1_ref, b1_ref, w2_ref, b2_ref, o_ref):
    """One (TM, n_in) f32 batch tile -> one (TM, n_out) f32 output tile.

    MXU operands are bf16 (x cast in-kernel, weights stored bf16); accumulation
    is f32 via preferred_element_type. Bias add and LeakyReLU run on the f32
    accumulator on the VPU.
    """
    x = x_ref[...].astype(w0_ref.dtype)  # in-kernel cast: no extra HBM pass

    # Layer 0: Linear + LeakyReLU
    h = jnp.dot(x, w0_ref[...], preferred_element_type=jnp.float32)
    h = _leaky_relu(h + b0_ref[...])

    # Layer 1: Linear + LeakyReLU
    h = jnp.dot(h.astype(w1_ref.dtype), w1_ref[...],
                preferred_element_type=jnp.float32)
    h = _leaky_relu(h + b1_ref[...])

    # Layer 2: Linear (output)
    out = jnp.dot(h.astype(w2_ref.dtype), w2_ref[...],
                  preferred_element_type=jnp.float32)
    o_ref[...] = (out + b2_ref[...]).astype(o_ref.dtype)


def mlp_forward(x, params, *, block_batch=512, compute_dtype=jnp.bfloat16):
    """Run the fused MLP on x of shape [B, n_input]; returns [B, n_output] f32."""
    w0, b0, w1, b1, w2, b2 = params
    batch, n_input = x.shape
    n_output = w2.shape[1]

    # Weights -> bf16 MXU operands (tiny, cast once, stay VMEM-resident).
    w0_c, w1_c, w2_c = (w.astype(compute_dtype) for w in (w0, w1, w2))
    # Biases stay f32 (added to the f32 accumulator).
    b0_c, b1_c, b2_c = (b.astype(jnp.float32) for b in (b0, b1, b2))

    # Batch tiling: TM rows per grid step (multiple of 8 sublanes).
    tm = max(8, _round_up(min(block_batch, batch), 8))
    batch_pad = _round_up(batch, tm)
    x_in = x.astype(jnp.float32)
    if batch_pad != batch:
        x_in = jnp.pad(x_in, ((0, batch_pad - batch), (0, 0)))
    grid = (batch_pad // tm,)

    vmem = pltpu.MemorySpace.VMEM
    # Resident (constant index_map) operands: weights + biases, DMA'd once.
    resident = lambda a: pl.BlockSpec(a.shape, lambda i: (0, 0),
                                      memory_space=vmem)

    out = pl.pallas_call(
        mlp_kernel,
        out_shape=jax.ShapeDtypeStruct((batch_pad, n_output), jnp.float32),
        grid=grid,
        in_specs=[
            pl.BlockSpec((tm, n_input), lambda i: (i, 0), memory_space=vmem),
            resident(w0_c), resident(b0_c),
            resident(w1_c), resident(b1_c),
            resident(w2_c), resident(b2_c),
        ],
        out_specs=pl.BlockSpec((tm, n_output), lambda i: (i, 0),
                               memory_space=vmem),
        compiler_params=pltpu.CompilerParams(
            dimension_semantics=("parallel",)),
    )(x_in, w0_c, b0_c, w1_c, b1_c, w2_c, b2_c)

    if batch_pad != batch:
        out = out[:batch]
    return out


def init_params(key, n_input, n_hidden_unit_list, n_output, dtype=jnp.float32):
    """nn.Linear-style uniform(-1/sqrt(fan_in), 1/sqrt(fan_in)) init.
    Weights stored as [in, out] (transposed vs. PyTorch) so y = x @ W + b."""
    dims = [n_input, n_hidden_unit_list[0], n_hidden_unit_list[1], n_output]
    params = []
    for i in range(3):
        fan_in, fan_out = dims[i], dims[i + 1]
        key, kw, kb = jax.random.split(key, 3)
        bound = 1.0 / jnp.sqrt(jnp.float32(fan_in))
        w = jax.random.uniform(kw, (fan_in, fan_out), dtype, -bound, bound)
        b = jax.random.uniform(kb, (1, fan_out), dtype, -bound, bound)
        params += [w, b]
    return tuple(params)


def reference_forward(x, params, compute_dtype=None):
    """Plain JAX reference. With compute_dtype=bf16 it mirrors the kernel's
    mixed-precision math (bf16 dot operands, f32 accumulation/bias/activation);
    with compute_dtype=None it is the pure-f32 PyTorch-equivalent forward."""
    w0, b0, w1, b1, w2, b2 = params
    cast = (lambda a: a) if compute_dtype is None else (lambda a: a.astype(compute_dtype))
    h = jnp.dot(cast(x), cast(w0), preferred_element_type=jnp.float32)
    h = _leaky_relu(h + b0.astype(jnp.float32))
    h = jnp.dot(cast(h), cast(w1), preferred_element_type=jnp.float32)
    h = _leaky_relu(h + b1.astype(jnp.float32))
    out = jnp.dot(cast(h), cast(w2), preferred_element_type=jnp.float32)
    return out + b2.astype(jnp.float32)


if __name__ == "__main__":
    # Shapes consistent with the module: n_input=32, hidden=[64, 32], n_output=16.
    batch, n_input, n_output = 8, 32, 16
    n_hidden_unit_list = [64, 32]

    key = jax.random.PRNGKey(0)
    key, kx = jax.random.split(key)
    x = jax.random.normal(kx, (batch, n_input), jnp.float32)
    params = init_params(key, n_input, n_hidden_unit_list, n_output)

    # Small run (single grid step, tm == batch).
    out = jax.block_until_ready(mlp_forward(x, params))
    assert out.shape == (batch, n_output)

    ref_matched = reference_forward(x, params, compute_dtype=jnp.bfloat16)
    assert jnp.allclose(out, ref_matched, atol=1e-3, rtol=1e-3), \
        "mismatch vs bf16-matched reference"

    ref_f32 = reference_forward(x, params)
    assert jnp.allclose(out, ref_f32, atol=5e-2, rtol=5e-2), \
        "mismatch vs f32 reference"

    # Larger, non-divisible batch: exercises the multi-step pipelined batch
    # grid, VMEM-resident weights, batch padding, and the parallel batch axis.
    key, kx2 = jax.random.split(key)
    x_big = jax.random.normal(kx2, (1000, n_input), jnp.float32)
    out_big = jax.block_until_ready(mlp_forward(x_big, params, block_batch=512))
    ref_big = reference_forward(x_big, params, compute_dtype=jnp.bfloat16)
    assert out_big.shape == (1000, n_output)
    assert jnp.allclose(out_big, ref_big, atol=1e-3, rtol=1e-3), \
        "mismatch vs bf16-matched reference (large batch)"

    print("KERNEL_OK")
</pallas_src>

<mosaic_0001>
module attributes {stable_mosaic.version = 11 : i64} {
  func.func @mlp_kernel(%arg0: i32, %arg1: memref<8x32xf32, #tpu.memory_space<vmem>>, %arg2: memref<32x64xbf16, #tpu.memory_space<vmem>>, %arg3: memref<1x64xf32, #tpu.memory_space<vmem>>, %arg4: memref<64x32xbf16, #tpu.memory_space<vmem>>, %arg5: memref<1x32xf32, #tpu.memory_space<vmem>>, %arg6: memref<32x16xbf16, #tpu.memory_space<vmem>>, %arg7: memref<1x16xf32, #tpu.memory_space<vmem>>, %arg8: memref<8x16xf32, #tpu.memory_space<vmem>>) attributes {dimension_semantics = [#tpu.dimension_semantics<parallel>], iteration_bounds = array<i64: 1>, scalar_prefetch = 0 : i64, scratch_operands = 0 : i64, tpu.core_type = #tpu.core_type<tc>, window_params = [{transform_indices = @transform_0, window_bounds = array<i64: 8, 32>}, {pipeline_mode = #tpu.pipeline_mode<synchronous>, transform_indices = @transform_1, window_bounds = array<i64: 32, 64>}, {pipeline_mode = #tpu.pipeline_mode<synchronous>, transform_indices = @transform_2, window_bounds = array<i64: 1, 64>}, {pipeline_mode = #tpu.pipeline_mode<synchronous>, transform_indices = @transform_3, window_bounds = array<i64: 64, 32>}, {pipeline_mode = #tpu.pipeline_mode<synchronous>, transform_indices = @transform_4, window_bounds = array<i64: 1, 32>}, {pipeline_mode = #tpu.pipeline_mode<synchronous>, transform_indices = @transform_5, window_bounds = array<i64: 32, 16>}, {pipeline_mode = #tpu.pipeline_mode<synchronous>, transform_indices = @transform_6, window_bounds = array<i64: 1, 16>}, {transform_indices = @transform_7, window_bounds = array<i64: 8, 16>}]} {
    %c0 = arith.constant 0 : index
    %c0_0 = arith.constant 0 : index
    %0 = vector.load %arg1[%c0, %c0_0] : memref<8x32xf32, #tpu.memory_space<vmem>>, vector<8x32xf32>
    %1 = arith.truncf %0 : vector<8x32xf32> to vector<8x32xbf16>
    %c0_1 = arith.constant 0 : index
    %c0_2 = arith.constant 0 : index
    %2 = vector.load %arg2[%c0_1, %c0_2] : memref<32x64xbf16, #tpu.memory_space<vmem>>, vector<32x64xbf16>
    %cst = arith.constant dense<0.000000e+00> : vector<8x64xf32>
    %3 = tpu.matmul %1, %2, %cst {dimension_numbers = #tpu.dot_dimension_numbers<[1], [0], [0], [1], [0, 0, 1, 1], [], []>} : vector<8x32xbf16>, vector<32x64xbf16>, vector<8x64xf32> -> vector<8x64xf32>
    %c0_3 = arith.constant 0 : index
    %c0_4 = arith.constant 0 : index
    %4 = vector.load %arg3[%c0_3, %c0_4] : memref<1x64xf32, #tpu.memory_space<vmem>>, vector<1x64xf32>
    %5 = vector.broadcast %4 : vector<1x64xf32> to vector<8x64xf32>
    %6 = arith.addf %3, %5 : vector<8x64xf32>
    %cst_5 = arith.constant 0.000000e+00 : f32
    %7 = vector.broadcast %cst_5 : f32 to vector<8x64xf32>
    %8 = arith.cmpf ogt, %6, %7 : vector<8x64xf32>
    %cst_6 = arith.constant 0.00999999977 : f32
    %9 = vector.broadcast %cst_6 : f32 to vector<8x64xf32>
    %10 = arith.mulf %9, %6 : vector<8x64xf32>
    %11 = arith.select %8, %6, %10 : vector<8x64xi1>, vector<8x64xf32>
    %12 = arith.truncf %11 : vector<8x64xf32> to vector<8x64xbf16>
    %c0_7 = arith.constant 0 : index
    %c0_8 = arith.constant 0 : index
    %13 = vector.load %arg4[%c0_7, %c0_8] : memref<64x32xbf16, #tpu.memory_space<vmem>>, vector<64x32xbf16>
    %cst_9 = arith.constant dense<0.000000e+00> : vector<8x32xf32>
    %14 = tpu.matmul %12, %13, %cst_9 {dimension_numbers = #tpu.dot_dimension_numbers<[1], [0], [0], [1], [0, 0, 1, 1], [], []>} : vector<8x64xbf16>, vector<64x32xbf16>, vector<8x32xf32> -> vector<8x32xf32>
    %c0_10 = arith.constant 0 : index
    %c0_11 = arith.constant 0 : index
    %15 = vector.load %arg5[%c0_10, %c0_11] : memref<1x32xf32, #tpu.memory_space<vmem>>, vector<1x32xf32>
    %16 = vector.broadcast %15 : vector<1x32xf32> to vector<8x32xf32>
    %17 = arith.addf %14, %16 : vector<8x32xf32>
    %cst_12 = arith.constant 0.000000e+00 : f32
    %18 = vector.broadcast %cst_12 : f32 to vector<8x32xf32>
    %19 = arith.cmpf ogt, %17, %18 : vector<8x32xf32>
    %cst_13 = arith.constant 0.00999999977 : f32
    %20 = vector.broadcast %cst_13 : f32 to vector<8x32xf32>
    %21 = arith.mulf %20, %17 : vector<8x32xf32>
    %22 = arith.select %19, %17, %21 : vector<8x32xi1>, vector<8x32xf32>
    %23 = arith.truncf %22 : vector<8x32xf32> to vector<8x32xbf16>
    %c0_14 = arith.constant 0 : index
    %c0_15 = arith.constant 0 : index
    %24 = vector.load %arg6[%c0_14, %c0_15] : memref<32x16xbf16, #tpu.memory_space<vmem>>, vector<32x16xbf16>
    %cst_16 = arith.constant dense<0.000000e+00> : vector<8x16xf32>
    %25 = tpu.matmul %23, %24, %cst_16 {dimension_numbers = #tpu.dot_dimension_numbers<[1], [0], [0], [1], [0, 0, 1, 1], [], []>} : vector<8x32xbf16>, vector<32x16xbf16>, vector<8x16xf32> -> vector<8x16xf32>
    %c0_17 = arith.constant 0 : index
    %c0_18 = arith.constant 0 : index
    %26 = vector.load %arg7[%c0_17, %c0_18] : memref<1x16xf32, #tpu.memory_space<vmem>>, vector<1x16xf32>
    %27 = vector.broadcast %26 : vector<1x16xf32> to vector<8x16xf32>
    %28 = arith.addf %25, %27 : vector<8x16xf32>
    %c0_19 = arith.constant 0 : index
    %c0_20 = arith.constant 0 : index
    %29 = vector.load %arg8[%c0_19, %c0_20] : memref<8x16xf32, #tpu.memory_space<vmem>>, vector<8x16xf32>
    tpu.vector_store %arg8[%c0_19, %c0_20], %28 {strides = array<i32>} : memref<8x16xf32, #tpu.memory_space<vmem>>, vector<8x16xf32>,
    return
  }
  func.func @transform_0(%arg0: i32) -> (i32, i32) {
    %c0_i32 = arith.constant 0 : i32
    %c0_i32_0 = arith.constant 0 : i32
    return %arg0, %c0_i32 : i32, i32
  }
  func.func @transform_1(%arg0: i32) -> (i32, i32) {
    %c0_i32 = arith.constant 0 : i32
    %c0_i32_0 = arith.constant 0 : i32
    %c0_i32_1 = arith.constant 0 : i32
    return %c0_i32, %c0_i32_0 : i32, i32
  }
  func.func @transform_2(%arg0: i32) -> (i32, i32) {
    %c0_i32 = arith.constant 0 : i32
    %c0_i32_0 = arith.constant 0 : i32
    %c0_i32_1 = arith.constant 0 : i32
    return %c0_i32, %c0_i32_0 : i32, i32
  }
  func.func @transform_3(%arg0: i32) -> (i32, i32) {
    %c0_i32 = arith.constant 0 : i32
    %c0_i32_0 = arith.constant 0 : i32
    %c0_i32_1 = arith.constant 0 : i32
    return %c0_i32, %c0_i32_0 : i32, i32
  }
  func.func @transform_4(%arg0: i32) -> (i32, i32) {
    %c0_i32 = arith.constant 0 : i32
    %c0_i32_0 = arith.constant 0 : i32
    %c0_i32_1 = arith.constant 0 : i32
    return %c0_i32, %c0_i32_0 : i32, i32
  }
  func.func @transform_5(%arg0: i32) -> (i32, i32) {
    %c0_i32 = arith.constant 0 : i32
    %c0_i32_0 = arith.constant 0 : i32
    %c0_i32_1 = arith.constant 0 : i32
    return %c0_i32, %c0_i32_0 : i32, i32
  }
  func.func @transform_6(%arg0: i32) -> (i32, i32) {
    %c0_i32 = arith.constant 0 : i32
    %c0_i32_0 = arith.constant 0 : i32
    %c0_i32_1 = arith.constant 0 : i32
    return %c0_i32, %c0_i32_0 : i32, i32
  }
  func.func @transform_7(%arg0: i32) -> (i32, i32) {
    %c0_i32 = arith.constant 0 : i32
    %c0_i32_0 = arith.constant 0 : i32
    return %arg0, %c0_i32 : i32, i32
  }
}

</mosaic_0001>

<llo_original>
// kernel: tpu_custom_call.1
$region0: #{tpu_custom_call.1}
  #allocation0 [shape = 'u32[]', space=smem, size = 0x4, offset = 0x4, fixed_abs, tag = 'smem constant byte address 0x4 - core index']
  #allocation1 [shape = 'u32[144,128]{1,0:T(1,128)}', space=vmem, size = 0x12000, scoped, tag = 'internal scratch']
  %s0 = inlined_call_operand.vmem [shape: f32[8,32], index: 0, kind: input, shape index: {}]
  %s1 = inlined_call_operand.vmem [shape: bf16[32,64], index: 1, kind: input, shape index: {}]
  %s2 = inlined_call_operand.vmem [shape: f32[1,64], index: 2, kind: input, shape index: {}]
  %s3 = inlined_call_operand.vmem [shape: bf16[64,32], index: 3, kind: input, shape index: {}]
  %s4 = inlined_call_operand.vmem [shape: f32[1,32], index: 4, kind: input, shape index: {}]
  %s5 = inlined_call_operand.vmem [shape: bf16[32,16], index: 5, kind: input, shape index: {}]
  %s6 = inlined_call_operand.vmem [shape: f32[1,16], index: 6, kind: input, shape index: {}]
  %s7 = inlined_call_operand.hbm [shape: f32[8,16], index: 7, kind: output, shape index: {}]
  %s8 = sld [smem:[#allocation0]]
  $region38: #{tpu_custom_call.1} parent=0
    _
  %s10 = ssub.s32 1, %s8
  %s11 = scalar_select 0, %s10, %s8
  $region1: #{tpu_custom_call.1} parent=0
    #allocation2 [shape = 'u8[4096]{0}', space=vmem, size = 0x1000, scoped, tag = 'output window, operand 0, single buffered']
    #allocation3 [shape = 's32[1]{0}', space=sflag, size = 0x4, scoped, tag = 'scoped memory for tpu_custom_call.1']
    %12 = vsyncpa [#allocation3], 0
    // Predicated region
    $region2: #{tpu_custom_call.1} parent=1 // pred_check
      _
    $region3: #{tpu_custom_call.1} parent=1 // pred_check_branch
      %14 = sbr.rel (0) target = $region5
    $region4: #{tpu_custom_call.1} parent=1 // pred_region
      _
    $region5: #{tpu_custom_call.1} parent=1 // pred_fallthru
      _
    // Predicated region
    $region6: #{tpu_custom_call.1} parent=1 // pred_check
      _
    $region7: #{tpu_custom_call.1} parent=1 // pred_check_branch
      %16 = sbr.rel (0) target = $region9
    $region8: #{tpu_custom_call.1} parent=1 // pred_region
      _
    $region9: #{tpu_custom_call.1} parent=1 // pred_fallthru
      _
    // Predicated region
    $region10: #{tpu_custom_call.1} parent=1 // pred_check
      _
    $region11: #{tpu_custom_call.1} parent=1 // pred_check_branch
      %18 = sbr.rel (0) target = $region13
    $region12: #{tpu_custom_call.1} parent=1 // pred_region
      _
    $region13: #{tpu_custom_call.1} parent=1 // pred_fallthru
      _
    // Predicated region
    $region14: #{tpu_custom_call.1} parent=1 // pred_check
      _
    $region15: #{tpu_custom_call.1} parent=1 // pred_check_branch
      %20 = sbr.rel (0) target = $region17
    $region16: #{tpu_custom_call.1} parent=1 // pred_region
      _
    $region17: #{tpu_custom_call.1} parent=1 // pred_fallthru
      _
    // Predicated region
    $region18: #{tpu_custom_call.1} parent=1 // pred_check
      _
    $region19: #{tpu_custom_call.1} parent=1 // pred_check_branch
      %22 = sbr.rel (0) target = $region21
    $region20: #{tpu_custom_call.1} parent=1 // pred_region
      _
    $region21: #{tpu_custom_call.1} parent=1 // pred_fallthru
      _
    // Predicated region
    $region22: #{tpu_custom_call.1} parent=1 // pred_check
      _
    $region23: #{tpu_custom_call.1} parent=1 // pred_check_branch
      %24 = sbr.rel (0) target = $region25
    $region24: #{tpu_custom_call.1} parent=1 // pred_region
      _
    $region25: #{tpu_custom_call.1} parent=1 // pred_fallthru
      _
    // Predicated region
    $region26: #{tpu_custom_call.1} parent=1 // pred_check
      _
    $region27: #{tpu_custom_call.1} parent=1 // pred_check_branch
      %26 = sbr.rel (0) target = $region29
    $region28: #{tpu_custom_call.1} parent=1 // pred_region
      _
    $region29: #{tpu_custom_call.1} parent=1 // pred_fallthru
      _
    %v28 = vld [vmem:[%s0] sm:$0xff]
    %v29 = vpack.c.bf16 %v28, %v28
    %v30 = vld [vmem:[%s1] sm:$0xf]
    %v31 = vld [vmem:[%s1 + $0x4] sm:$0xf]
    %v32 = vld [vmem:[%s1 + $0x8] sm:$0xf]
    %v33 = vld [vmem:[%s1 + $0xc] sm:$0xf]
    %v34 = vld [vmem:[%s2] sm:$0x1]
    %v36 = vlaneseq
    %v37 = vshrl.u32 %v36, 7
    %v38 = vsub.s32 0, %v37
    %v39 = vrot.slane %v34, %v38
    %v45 = vunpack.c.l.b16 %v30
    %v46 = vunpack.c.l.b16 %v31
    %v47 = vunpack.c.l.b16 %v32
    %v48 = vunpack.c.l.b16 %v33
    %v49 = vpack.c.b16 %v46, %v45
    %v50 = vpack.c.b16 %v48, %v47
    %vm53 = vcmask 261120
    %v55 = vsel %vm53, %v29, 0
    %57 = vmatprep.subr.bf16.mxu0 0
    %58 = vmatpush1.bf16.msra.mxu0 0
    %59 = vmatprep.subr.bf16.mxu0 0
    %60 = vmatpush1.bf16.msra.mxu0 0
    %61 = vmatprep.subr.bf16.mxu0 0
    %62 = vmatpush1.bf16.msra.mxu0 0
    %63 = vmatprep.subr.bf16.mxu0 0
    %64 = vmatpush1.bf16.msra.mxu0 0
    %65 = vmatprep.subr.bf16.mxu0 0
    %66 = vmatpush1.bf16.msra.mxu0 0
    %67 = vmatprep.subr.bf16.mxu0 0
    %68 = vmatpush1.bf16.msra.mxu0 0
    %69 = vmatprep.subr.bf16.mxu0 0
    %70 = vmatpush1.bf16.msra.mxu0 %v50
    %71 = vmatprep.subr.bf16.mxu0 0
    %72 = vmatpush1.bf16.msra.mxu0 %v49
    %73 = vmatprep.subr.bf16.mxu0 0
    %74 = vmatpush2.bf16.msra.mxu0 0
    %75 = vmatprep.subr.bf16.mxu0 0
    %76 = vmatpush2.bf16.msra.mxu0 0
    %77 = vmatprep.subr.bf16.mxu0 0
    %78 = vmatpush2.bf16.msra.mxu0 0
    %79 = vmatprep.subr.bf16.mxu0 0
    %80 = vmatpush2.bf16.msra.mxu0 0
    %81 = vmatprep.subr.bf16.mxu0 0
    %82 = vmatpush2.bf16.msra.mxu0 0
    %83 = vmatprep.subr.bf16.mxu0 0
    %84 = vmatpush2.bf16.msra.mxu0 0
    %85 = vmatprep.subr.bf16.mxu0 0
    %86 = vmatpush2.bf16.msra.mxu0 0
    %87 = vmatprep.subr.bf16.mxu0 0
    %88 = vmatpush2.bf16.msra.mxu0 0
    %89 = vmatprep.mubr.bf16.mxu0 0
    %90 = vmatmul.mubr.bf16.gmra.mxu0 %v55
    %v91 = vpop.f32.mrf.mxu0
    %v92 = vadd.f32 %v39, %v91
    %v93 = vpop.f32.mrf.mxu0
    %v94 = vpop.f32.mrf.mxu0
    %v95 = vpop.f32.mrf.mxu0
    %96 = vdwg.mxu0
    %vm97 = vcmp.gt.f32.partialorder %v92, 0.0
    %v98 = vmul.f32 %v92, 0.01
    %v99 = vsel %vm97, %v92, %v98
    %v100 = vpack.c.bf16 %v99, %v99
    %v101 = vld [vmem:[%s3] sm:$0xf]
    %v102 = vld [vmem:[%s3 + $0x4] sm:$0xf]
    %v103 = vld [vmem:[%s3 + $0x8] sm:$0xf]
    %v104 = vld [vmem:[%s3 + $0xc] sm:$0xf]
    %v105 = vld [vmem:[%s3 + $0x10] sm:$0xf]
    %v106 = vld [vmem:[%s3 + $0x14] sm:$0xf]
    %v107 = vld [vmem:[%s3 + $0x18] sm:$0xf]
    %v108 = vld [vmem:[%s3 + $0x1c] sm:$0xf]
    %v109 = vld [vmem:[%s4] sm:$0x1]
    %v111 = vlaneseq
    %v112 = vshrl.u32 %v111, 7
    %v113 = vsub.s32 0, %v112
    %v114 = vrot.slane %v109, %v113
    %v124 = vunpack.c.l.b16 %v101
    %v125 = vunpack.c.l.b16 %v102
    %v126 = vunpack.c.l.b16 %v103
    %v127 = vunpack.c.l.b16 %v104
    %v128 = vunpack.c.l.b16 %v105
    %v129 = vunpack.c.l.b16 %v106
    %v130 = vunpack.c.l.b16 %v107
    %v131 = vunpack.c.l.b16 %v108
    %v132 = vpack.c.b16 %v125, %v124
    %v133 = vpack.c.b16 %v127, %v126
    %v134 = vpack.c.b16 %v129, %v128
    %v135 = vpack.c.b16 %v131, %v130
    %vm140 = vcmask 523264
    %v142 = vsel %vm140, %v100, 0
    %144 = vmatprep.subr.bf16.mxu0 0
    %145 = vmatpush1.bf16.msra.mxu0 0
    %146 = vmatprep.subr.bf16.mxu0 0
    %147 = vmatpush1.bf16.msra.mxu0 0
    %148 = vmatprep.subr.bf16.mxu0 0
    %149 = vmatpush1.bf16.msra.mxu0 0
    %150 = vmatprep.subr.bf16.mxu0 0
    %151 = vmatpush1.bf16.msra.mxu0 0
    %152 = vmatprep.subr.bf16.mxu0 0
    %153 = vmatpush1.bf16.msra.mxu0 %v135
    %154 = vmatprep.subr.bf16.mxu0 0
    %155 = vmatpush1.bf16.msra.mxu0 %v134
    %156 = vmatprep.subr.bf16.mxu0 0
    %157 = vmatpush1.bf16.msra.mxu0 %v133
    %158 = vmatprep.subr.bf16.mxu0 0
    %159 = vmatpush1.bf16.msra.mxu0 %v132
    %160 = vmatprep.subr.bf16.mxu0 0
    %161 = vmatpush2.bf16.msra.mxu0 0
    %162 = vmatprep.subr.bf16.mxu0 0
    %163 = vmatpush2.bf16.msra.mxu0 0
    %164 = vmatprep.subr.bf16.mxu0 0
    %165 = vmatpush2.bf16.msra.mxu0 0
    %166 = vmatprep.subr.bf16.mxu0 0
    %167 = vmatpush2.bf16.msra.mxu0 0
    %168 = vmatprep.subr.bf16.mxu0 0
    %169 = vmatpush2.bf16.msra.mxu0 0
    %170 = vmatprep.subr.bf16.mxu0 0
    %171 = vmatpush2.bf16.msra.mxu0 0
    %172 = vmatprep.subr.bf16.mxu0 0
    %173 = vmatpush2.bf16.msra.mxu0 0
    %174 = vmatprep.subr.bf16.mxu0 0
    %175 = vmatpush2.bf16.msra.mxu0 0
    %176 = vmatprep.mubr.bf16.mxu0 0
    %177 = vmatmul.mubr.bf16.gmra.mxu0 %v142
    %v178 = vpop.f32.mrf.mxu0
    %v179 = vadd.f32 %v114, %v178
    %v180 = vpop.f32.mrf.mxu0
    %v181 = vpop.f32.mrf.mxu0
    %v182 = vpop.f32.mrf.mxu0
    %183 = vdwg.mxu0
    %vm184 = vcmp.gt.f32.partialorder %v179, 0.0
    %v185 = vmul.f32 %v179, 0.01
    %v186 = vsel %vm184, %v179, %v185
    %v187 = vpack.c.bf16 %v186, %v186
    %v188 = vld [vmem:[%s5] sm:$0xf]
    %v189 = vld [vmem:[%s5 + $0x4] sm:$0xf]
    %v190 = vld [vmem:[%s5 + $0x8] sm:$0xf]
    %v191 = vld [vmem:[%s5 + $0xc] sm:$0xf]
    %v192 = vld [vmem:[%s6] sm:$0x1]
    %v194 = vlaneseq
    %v195 = vshrl.u32 %v194, 7
    %v196 = vsub.s32 0, %v195
    %v197 = vrot.slane %v192, %v196
    %v203 = vunpack.c.l.b16 %v188
    %v204 = vunpack.c.l.b16 %v189
    %v205 = vunpack.c.l.b16 %v190
    %v206 = vunpack.c.l.b16 %v191
    %v207 = vpack.c.b16 %v204, %v203
    %v208 = vpack.c.b16 %v206, %v205
    %v212 = vsel %vm53, %v187, 0
    %214 = vmatprep.subr.bf16.mxu0 0
    %215 = vmatpush1.bf16.msra.mxu0 0
    %216 = vmatprep.subr.bf16.mxu0 0
    %217 = vmatpush1.bf16.msra.mxu0 0
    %218 = vmatprep.subr.bf16.mxu0 0
    %219 = vmatpush1.bf16.msra.mxu0 0
    %220 = vmatprep.subr.bf16.mxu0 0
    %221 = vmatpush1.bf16.msra.mxu0 0
    %222 = vmatprep.subr.bf16.mxu0 0
    %223 = vmatpush1.bf16.msra.mxu0 0
    %224 = vmatprep.subr.bf16.mxu0 0
    %225 = vmatpush1.bf16.msra.mxu0 0
    %226 = vmatprep.subr.bf16.mxu0 0
    %227 = vmatpush1.bf16.msra.mxu0 %v208
    %228 = vmatprep.subr.bf16.mxu0 0
    %229 = vmatpush1.bf16.msra.mxu0 %v207
    %230 = vmatprep.subr.bf16.mxu0 0
    %231 = vmatpush2.bf16.msra.mxu0 0
    %232 = vmatprep.subr.bf16.mxu0 0
    %233 = vmatpush2.bf16.msra.mxu0 0
    %234 = vmatprep.subr.bf16.mxu0 0
    %235 = vmatpush2.bf16.msra.mxu0 0
    %236 = vmatprep.subr.bf16.mxu0 0
    %237 = vmatpush2.bf16.msra.mxu0 0
    %238 = vmatprep.subr.bf16.mxu0 0
    %239 = vmatpush2.bf16.msra.mxu0 0
    %240 = vmatprep.subr.bf16.mxu0 0
    %241 = vmatpush2.bf16.msra.mxu0 0
    %242 = vmatprep.subr.bf16.mxu0 0
    %243 = vmatpush2.bf16.msra.mxu0 0
    %244 = vmatprep.subr.bf16.mxu0 0
    %245 = vmatpush2.bf16.msra.mxu0 0
    %246 = vmatprep.mubr.bf16.mxu0 0
    %247 = vmatmul.mubr.bf16.gmra.mxu0 %v212
    %v248 = vpop.f32.mrf.mxu0
    %v249 = vadd.f32 %v197, %v248
    %v250 = vpop.f32.mrf.mxu0
    %v251 = vpop.f32.mrf.mxu0
    %v252 = vpop.f32.mrf.mxu0
    %253 = vdwg.mxu0
    %vm254 = vcmask 130048
    %255 = vst.msk [vmem:[#allocation2] sm:$0xff] %vm254, %v249
    // Predicated region
    $region30: #{tpu_custom_call.1} parent=1 // pred_check
      _
    $region31: #{tpu_custom_call.1} parent=1 // pred_check_branch
      %257 = sbr.rel (0) target = $region33
    $region32: #{tpu_custom_call.1} parent=1 // pred_region
      %s259 = ssub.s32 128, 128
      %260 = vsyncadd [#allocation3], %s259
      %s262 = sshll.u32 [#allocation2], 4
      %s263 = int_to_ptr.vmem [resolvable:$true] %s262
      %265 = dma.vmem_to_hbm [thread:$0]  %s263, 128, %s7, [#allocation3]
    $region33: #{tpu_custom_call.1} parent=1 // pred_fallthru
      _
    // Predicated region
    $region34: #{tpu_custom_call.1} parent=1 // pred_check
      _
    $region35: #{tpu_custom_call.1} parent=1 // pred_check_branch
      %267 = sbr.rel (0) target = $region37
    $region36: #{tpu_custom_call.1} parent=1 // pred_region
      %268 = dma.done [#allocation3], 128
    $region37: #{tpu_custom_call.1} parent=1 // pred_fallthru
      _
    %269 = vsyncpa [#allocation3], 1

</llo_original>
